<compile_context>
chip_gen: v6e
topology: v6e:2x2x1
jax: 0.10.0
libtpu: 0.0.40
codegen_flags: <defaults>
</compile_context>

<pallas_src>
import functools

import jax
import jax.numpy as jnp
from jax import lax
from jax.experimental import pallas as pl
from jax.experimental.pallas import tpu as pltpu

_UNROLL_K_MAX = 8  # Python-unroll the Gibbs chain up to this k, fori_loop beyond.


def _rbm_kernel(v_ref, wt_ref, w_ref, th_h_ref, th_v_ref, vout_ref, *, k, compute_dtype):
    """One batch tile of the full CD-k chain.

    v_ref    : (Bb, n_vis)       f32           visible input tile
    wt_ref   : (n_vis, n_hin)    compute_dtype W.T (resident across the grid)
    w_ref    : (n_hin, n_vis)    compute_dtype W   (resident across the grid)
    th_h_ref : (k+1, Bb, n_hin)  f32           logit(U_h) - h_bias
    th_v_ref : (k,   Bb, n_vis)  f32           logit(U_v) - v_bias
    vout_ref : (Bb, n_vis)       f32           last visible sample
    """
    wt = wt_ref[...]
    w = w_ref[...]

    def sample_h(vis, step):
        # sigmoid(vis @ W.T + h_bias) > U  <=>  vis @ W.T > logit(U) - h_bias
        logits = jnp.dot(vis, wt, preferred_element_type=jnp.float32)
        return jnp.where(logits > th_h_ref[step], 1.0, 0.0).astype(compute_dtype)

    def sample_v(hid, step):
        logits = jnp.dot(hid, w, preferred_element_type=jnp.float32)
        return jnp.where(logits > th_v_ref[step], 1.0, 0.0).astype(compute_dtype)

    v = v_ref[...].astype(compute_dtype)
    h = sample_h(v, 0)

    if k <= _UNROLL_K_MAX:
        v_s = v
        for i in range(k):
            v_s = sample_v(h, i)
            h = sample_h(v_s, i + 1)
    else:
        def body(i, carry):
            _, h_c = carry
            v_c = sample_v(h_c, i)
            h_c = sample_h(v_c, i + 1)
            return (v_c, h_c)

        v_s, h = lax.fori_loop(0, k, body, (v, h))

    vout_ref[...] = v_s.astype(vout_ref.dtype)


def _round_up(x, m):
    return (x + m - 1) // m * m


def _pick_block_b(B, n_vis, n_hin, k, budget_bytes=20 << 20):
    """Largest batch tile (multiple of 8) whose double-buffered tiles fit the budget."""
    per_row = 4 * ((k + 1) * n_hin + k * n_vis)          # f32 thresholds per batch row
    per_row = 2 * per_row + 2 * 4 * n_vis + 4 * n_vis    # double-buffered + v in + out
    blk = (budget_bytes // max(per_row, 1)) // 8 * 8
    blk = max(8, min(blk, 512, _round_up(B, 8)))
    return blk


def rbm_v2_forward(v, W, v_bias, h_bias, rand_h, rand_v, k, *, block_b=None, use_bf16=True):
    """Pallas TPU implementation of RBM_v2.forward. Returns (v, v_)."""
    assert k >= 1
    B, n_vis = v.shape
    n_hin = W.shape[0]
    assert W.shape == (n_hin, n_vis)
    assert rand_h.shape == (k + 1, B, n_hin)
    assert rand_v.shape == (k, B, n_vis)

    compute_dtype = jnp.bfloat16 if use_bf16 else jnp.float32

    # sigmoid(x + b) > r  <=>  x > logit(r) - b ;  logit(r) = log(r) - log1p(-r).
    # (r == 0 -> -inf threshold -> always sampled 1, matching sigmoid(x) > 0.)
    def _thresholds(r, bias):
        return (jnp.log(r) - jnp.log1p(-r)).astype(jnp.float32) - bias.astype(jnp.float32)

    th_h = _thresholds(rand_h, h_bias.reshape(1, 1, n_hin))
    th_v = _thresholds(rand_v, v_bias.reshape(1, 1, n_vis))

    w_c = W.astype(compute_dtype)            # (n_hin, n_vis)  for h @ W
    wt_c = W.T.astype(compute_dtype)         # (n_vis, n_hin)  for v @ W.T (transposed once)

    if block_b is None:
        block_b = _pick_block_b(B, n_vis, n_hin, k)
    block_b = max(8, _round_up(min(block_b, _round_up(B, 8)), 8))

    B_pad = _round_up(B, block_b)
    v_in = v.astype(jnp.float32)
    if B_pad != B:
        pad = B_pad - B
        v_in = jnp.pad(v_in, ((0, pad), (0, 0)))
        th_h = jnp.pad(th_h, ((0, 0), (0, pad), (0, 0)))
        th_v = jnp.pad(th_v, ((0, 0), (0, pad), (0, 0)))

    grid = (B_pad // block_b,)
    kernel = functools.partial(_rbm_kernel, k=k, compute_dtype=compute_dtype)

    itemsize = jnp.dtype(compute_dtype).itemsize
    cost = pl.CostEstimate(
        flops=int((2 * k + 1) * 2 * B_pad * n_vis * n_hin),
        transcendentals=0,
        bytes_accessed=int(
            v_in.size * 4
            + (w_c.size + wt_c.size) * itemsize
            + (th_h.size + th_v.size) * 4
            + B_pad * n_vis * 4
        ),
    )

    v_out = pl.pallas_call(
        kernel,
        out_shape=jax.ShapeDtypeStruct((B_pad, n_vis), jnp.float32),
        grid=grid,
        in_specs=[
            pl.BlockSpec((block_b, n_vis), lambda i: (i, 0)),          # v tile
            pl.BlockSpec((n_vis, n_hin), lambda i: (0, 0)),            # W.T (resident)
            pl.BlockSpec((n_hin, n_vis), lambda i: (0, 0)),            # W   (resident)
            pl.BlockSpec((k + 1, block_b, n_hin), lambda i: (0, i, 0)),  # hidden thresholds
            pl.BlockSpec((k, block_b, n_vis), lambda i: (0, i, 0)),      # visible thresholds
        ],
        out_specs=pl.BlockSpec((block_b, n_vis), lambda i: (i, 0)),
        compiler_params=pltpu.CompilerParams(
            dimension_semantics=("parallel",),
            vmem_limit_bytes=48 * 1024 * 1024,
        ),
        cost_estimate=cost,
    )(v_in, wt_c, w_c, th_h, th_v)

    return v, v_out[:B]


def _reference_forward(v, W, v_bias, h_bias, rand_h, rand_v, k):
    """Pure-JAX f32 reference mirroring the PyTorch module."""
    def sample(p, r):
        return jnp.where(p > r, 1.0, 0.0)

    def v_to_h(vis, r):
        return sample(jax.nn.sigmoid(vis @ W.T + h_bias), r)

    def h_to_v(hid, r):
        return sample(jax.nn.sigmoid(hid @ W + v_bias), r)

    h = v_to_h(v, rand_h[0])
    v_s = v
    for i in range(k):
        v_s = h_to_v(h, rand_v[i])
        h = v_to_h(v_s, rand_h[i + 1])
    return v, v_s


if __name__ == "__main__":
    # Small, TPU-friendly shapes consistent with the module's (batch, n_vis) input.
    B, n_vis, n_hin, k = 8, 256, 128, 5

    key = jax.random.PRNGKey(0)
    k_w, k_v, k_rh, k_rv = jax.random.split(key, 4)

    # Deterministic parameter init matching __init__: W ~ N(0,1)*0.01, biases zero.
    W = jax.random.normal(k_w, (n_hin, n_vis), dtype=jnp.float32) * 0.01
    v_bias = jnp.zeros((n_vis,), dtype=jnp.float32)
    h_bias = jnp.zeros((n_hin,), dtype=jnp.float32)

    # Binary-ish visible input (like binarized MNIST pixels).
    v = (jax.random.uniform(k_v, (B, n_vis), dtype=jnp.float32) > 0.5).astype(jnp.float32)

    # Pre-drawn uniforms for every sampling step (k+1 hidden samples, k visible samples).
    rand_h = jax.random.uniform(k_rh, (k + 1, B, n_hin), dtype=jnp.float32)
    rand_v = jax.random.uniform(k_rv, (k, B, n_vis), dtype=jnp.float32)

    # Fast (default) bf16-matmul path.
    v_ret, v_fast = rbm_v2_forward(v, W, v_bias, h_bias, rand_h, rand_v, k, use_bf16=True)
    jax.block_until_ready(v_fast)

    # f32 validation path (faithful to the PyTorch math up to compare-boundary ULPs).
    _, v_exact = rbm_v2_forward(v, W, v_bias, h_bias, rand_h, rand_v, k, use_bf16=False)
    jax.block_until_ready(v_exact)

    _, v_ref = _reference_forward(v, W, v_bias, h_bias, rand_h, rand_v, k)

    assert v_ret.shape == (B, n_vis) and v_fast.shape == (B, n_vis)
    assert bool(jnp.all(v_ret == v))
    # Samples must be strictly binary.
    assert bool(jnp.all((v_fast == 0.0) | (v_fast == 1.0)))
    assert bool(jnp.all((v_exact == 0.0) | (v_exact == 1.0)))

    # f32 kernel vs faithful reference: only decision-boundary ULP flips tolerated.
    mismatch_exact = float(jnp.mean(jnp.abs(v_exact - v_ref)))
    assert mismatch_exact <= 5e-3, f"f32 kernel mismatch rate {mismatch_exact}"

    # bf16 fast path: rare boundary flips can propagate through the chain; require
    # the overall flip rate vs the f32 reference to remain small.
    mismatch_fast = float(jnp.mean(jnp.abs(v_fast - v_ref)))
    assert mismatch_fast <= 5e-2, f"bf16 kernel mismatch rate {mismatch_fast}"

    print("KERNEL_OK")
</pallas_src>

<mosaic_0001>
module attributes {stable_mosaic.version = 11 : i64} {
  func.func @_rbm_kernel(%arg0: i32, %arg1: memref<8x256xf32, #tpu.memory_space<vmem>>, %arg2: memref<256x128xbf16, #tpu.memory_space<vmem>>, %arg3: memref<128x256xbf16, #tpu.memory_space<vmem>>, %arg4: memref<6x8x128xf32, #tpu.memory_space<vmem>>, %arg5: memref<5x8x256xf32, #tpu.memory_space<vmem>>, %arg6: memref<8x256xf32, #tpu.memory_space<vmem>>) attributes {dimension_semantics = [#tpu.dimension_semantics<parallel>], iteration_bounds = array<i64: 1>, scalar_prefetch = 0 : i64, scratch_operands = 0 : i64, tpu.core_type = #tpu.core_type<tc>, window_params = [{transform_indices = @transform_0, window_bounds = array<i64: 8, 256>}, {pipeline_mode = #tpu.pipeline_mode<synchronous>, transform_indices = @transform_1, window_bounds = array<i64: 256, 128>}, {pipeline_mode = #tpu.pipeline_mode<synchronous>, transform_indices = @transform_2, window_bounds = array<i64: 128, 256>}, {transform_indices = @transform_3, window_bounds = array<i64: 6, 8, 128>}, {transform_indices = @transform_4, window_bounds = array<i64: 5, 8, 256>}, {transform_indices = @transform_5, window_bounds = array<i64: 8, 256>}]} {
    %c0 = arith.constant 0 : index
    %c0_0 = arith.constant 0 : index
    %0 = vector.load %arg2[%c0, %c0_0] : memref<256x128xbf16, #tpu.memory_space<vmem>>, vector<256x128xbf16>
    %c0_1 = arith.constant 0 : index
    %c0_2 = arith.constant 0 : index
    %1 = vector.load %arg3[%c0_1, %c0_2] : memref<128x256xbf16, #tpu.memory_space<vmem>>, vector<128x256xbf16>
    %c0_3 = arith.constant 0 : index
    %c0_4 = arith.constant 0 : index
    %2 = vector.load %arg1[%c0_3, %c0_4] : memref<8x256xf32, #tpu.memory_space<vmem>>, vector<8x256xf32>
    %3 = arith.truncf %2 : vector<8x256xf32> to vector<8x256xbf16>
    %cst = arith.constant dense<0.000000e+00> : vector<8x128xf32>
    %4 = tpu.matmul %3, %0, %cst {dimension_numbers = #tpu.dot_dimension_numbers<[1], [0], [0], [1], [0, 0, 1, 1], [], []>} : vector<8x256xbf16>, vector<256x128xbf16>, vector<8x128xf32> -> vector<8x128xf32>
    %c0_5 = arith.constant 0 : index
    %c0_6 = arith.constant 0 : index
    %c0_7 = arith.constant 0 : index
    %5 = vector.load %arg4[%c0_5, %c0_6, %c0_7] : memref<6x8x128xf32, #tpu.memory_space<vmem>>, vector<1x8x128xf32>
    %6 = vector.shape_cast %5 : vector<1x8x128xf32> to vector<8x128xf32>
    %7 = arith.cmpf ogt, %4, %6 : vector<8x128xf32>
    %cst_8 = arith.constant 1.000000e+00 : f32
    %cst_9 = arith.constant 0.000000e+00 : f32
    %8 = vector.broadcast %cst_8 : f32 to vector<8x128xf32>
    %9 = vector.broadcast %cst_9 : f32 to vector<8x128xf32>
    %10 = arith.select %7, %8, %9 : vector<8x128xi1>, vector<8x128xf32>
    %11 = arith.truncf %10 : vector<8x128xf32> to vector<8x128xbf16>
    %cst_10 = arith.constant dense<0.000000e+00> : vector<8x256xf32>
    %12 = tpu.matmul %11, %1, %cst_10 {dimension_numbers = #tpu.dot_dimension_numbers<[1], [0], [0], [1], [0, 0, 1, 1], [], []>} : vector<8x128xbf16>, vector<128x256xbf16>, vector<8x256xf32> -> vector<8x256xf32>
    %c0_11 = arith.constant 0 : index
    %c0_12 = arith.constant 0 : index
    %c0_13 = arith.constant 0 : index
    %13 = vector.load %arg5[%c0_11, %c0_12, %c0_13] : memref<5x8x256xf32, #tpu.memory_space<vmem>>, vector<1x8x256xf32>
    %14 = vector.shape_cast %13 : vector<1x8x256xf32> to vector<8x256xf32>
    %15 = arith.cmpf ogt, %12, %14 : vector<8x256xf32>
    %cst_14 = arith.constant 1.000000e+00 : f32
    %cst_15 = arith.constant 0.000000e+00 : f32
    %16 = vector.broadcast %cst_14 : f32 to vector<8x256xf32>
    %17 = vector.broadcast %cst_15 : f32 to vector<8x256xf32>
    %18 = arith.select %15, %16, %17 : vector<8x256xi1>, vector<8x256xf32>
    %19 = arith.truncf %18 : vector<8x256xf32> to vector<8x256xbf16>
    %cst_16 = arith.constant dense<0.000000e+00> : vector<8x128xf32>
    %20 = tpu.matmul %19, %0, %cst_16 {dimension_numbers = #tpu.dot_dimension_numbers<[1], [0], [0], [1], [0, 0, 1, 1], [], []>} : vector<8x256xbf16>, vector<256x128xbf16>, vector<8x128xf32> -> vector<8x128xf32>
    %c1 = arith.constant 1 : index
    %c0_17 = arith.constant 0 : index
    %c0_18 = arith.constant 0 : index
    %21 = vector.load %arg4[%c1, %c0_17, %c0_18] : memref<6x8x128xf32, #tpu.memory_space<vmem>>, vector<1x8x128xf32>
    %22 = vector.shape_cast %21 : vector<1x8x128xf32> to vector<8x128xf32>
    %23 = arith.cmpf ogt, %20, %22 : vector<8x128xf32>
    %cst_19 = arith.constant 1.000000e+00 : f32
    %cst_20 = arith.constant 0.000000e+00 : f32
    %24 = vector.broadcast %cst_19 : f32 to vector<8x128xf32>
    %25 = vector.broadcast %cst_20 : f32 to vector<8x128xf32>
    %26 = arith.select %23, %24, %25 : vector<8x128xi1>, vector<8x128xf32>
    %27 = arith.truncf %26 : vector<8x128xf32> to vector<8x128xbf16>
    %cst_21 = arith.constant dense<0.000000e+00> : vector<8x256xf32>
    %28 = tpu.matmul %27, %1, %cst_21 {dimension_numbers = #tpu.dot_dimension_numbers<[1], [0], [0], [1], [0, 0, 1, 1], [], []>} : vector<8x128xbf16>, vector<128x256xbf16>, vector<8x256xf32> -> vector<8x256xf32>
    %c1_22 = arith.constant 1 : index
    %c0_23 = arith.constant 0 : index
    %c0_24 = arith.constant 0 : index
    %29 = vector.load %arg5[%c1_22, %c0_23, %c0_24] : memref<5x8x256xf32, #tpu.memory_space<vmem>>, vector<1x8x256xf32>
    %30 = vector.shape_cast %29 : vector<1x8x256xf32> to vector<8x256xf32>
    %31 = arith.cmpf ogt, %28, %30 : vector<8x256xf32>
    %cst_25 = arith.constant 1.000000e+00 : f32
    %cst_26 = arith.constant 0.000000e+00 : f32
    %32 = vector.broadcast %cst_25 : f32 to vector<8x256xf32>
    %33 = vector.broadcast %cst_26 : f32 to vector<8x256xf32>
    %34 = arith.select %31, %32, %33 : vector<8x256xi1>, vector<8x256xf32>
    %35 = arith.truncf %34 : vector<8x256xf32> to vector<8x256xbf16>
    %cst_27 = arith.constant dense<0.000000e+00> : vector<8x128xf32>
    %36 = tpu.matmul %35, %0, %cst_27 {dimension_numbers = #tpu.dot_dimension_numbers<[1], [0], [0], [1], [0, 0, 1, 1], [], []>} : vector<8x256xbf16>, vector<256x128xbf16>, vector<8x128xf32> -> vector<8x128xf32>
    %c2 = arith.constant 2 : index
    %c0_28 = arith.constant 0 : index
    %c0_29 = arith.constant 0 : index
    %37 = vector.load %arg4[%c2, %c0_28, %c0_29] : memref<6x8x128xf32, #tpu.memory_space<vmem>>, vector<1x8x128xf32>
    %38 = vector.shape_cast %37 : vector<1x8x128xf32> to vector<8x128xf32>
    %39 = arith.cmpf ogt, %36, %38 : vector<8x128xf32>
    %cst_30 = arith.constant 1.000000e+00 : f32
    %cst_31 = arith.constant 0.000000e+00 : f32
    %40 = vector.broadcast %cst_30 : f32 to vector<8x128xf32>
    %41 = vector.broadcast %cst_31 : f32 to vector<8x128xf32>
    %42 = arith.select %39, %40, %41 : vector<8x128xi1>, vector<8x128xf32>
    %43 = arith.truncf %42 : vector<8x128xf32> to vector<8x128xbf16>
    %cst_32 = arith.constant dense<0.000000e+00> : vector<8x256xf32>
    %44 = tpu.matmul %43, %1, %cst_32 {dimension_numbers = #tpu.dot_dimension_numbers<[1], [0], [0], [1], [0, 0, 1, 1], [], []>} : vector<8x128xbf16>, vector<128x256xbf16>, vector<8x256xf32> -> vector<8x256xf32>
    %c2_33 = arith.constant 2 : index
    %c0_34 = arith.constant 0 : index
    %c0_35 = arith.constant 0 : index
    %45 = vector.load %arg5[%c2_33, %c0_34, %c0_35] : memref<5x8x256xf32, #tpu.memory_space<vmem>>, vector<1x8x256xf32>
    %46 = vector.shape_cast %45 : vector<1x8x256xf32> to vector<8x256xf32>
    %47 = arith.cmpf ogt, %44, %46 : vector<8x256xf32>
    %cst_36 = arith.constant 1.000000e+00 : f32
    %cst_37 = arith.constant 0.000000e+00 : f32
    %48 = vector.broadcast %cst_36 : f32 to vector<8x256xf32>
    %49 = vector.broadcast %cst_37 : f32 to vector<8x256xf32>
    %50 = arith.select %47, %48, %49 : vector<8x256xi1>, vector<8x256xf32>
    %51 = arith.truncf %50 : vector<8x256xf32> to vector<8x256xbf16>
    %cst_38 = arith.constant dense<0.000000e+00> : vector<8x128xf32>
    %52 = tpu.matmul %51, %0, %cst_38 {dimension_numbers = #tpu.dot_dimension_numbers<[1], [0], [0], [1], [0, 0, 1, 1], [], []>} : vector<8x256xbf16>, vector<256x128xbf16>, vector<8x128xf32> -> vector<8x128xf32>
    %c3 = arith.constant 3 : index
    %c0_39 = arith.constant 0 : index
    %c0_40 = arith.constant 0 : index
    %53 = vector.load %arg4[%c3, %c0_39, %c0_40] : memref<6x8x128xf32, #tpu.memory_space<vmem>>, vector<1x8x128xf32>
    %54 = vector.shape_cast %53 : vector<1x8x128xf32> to vector<8x128xf32>
    %55 = arith.cmpf ogt, %52, %54 : vector<8x128xf32>
    %cst_41 = arith.constant 1.000000e+00 : f32
    %cst_42 = arith.constant 0.000000e+00 : f32
    %56 = vector.broadcast %cst_41 : f32 to vector<8x128xf32>
    %57 = vector.broadcast %cst_42 : f32 to vector<8x128xf32>
    %58 = arith.select %55, %56, %57 : vector<8x128xi1>, vector<8x128xf32>
    %59 = arith.truncf %58 : vector<8x128xf32> to vector<8x128xbf16>
    %cst_43 = arith.constant dense<0.000000e+00> : vector<8x256xf32>
    %60 = tpu.matmul %59, %1, %cst_43 {dimension_numbers = #tpu.dot_dimension_numbers<[1], [0], [0], [1], [0, 0, 1, 1], [], []>} : vector<8x128xbf16>, vector<128x256xbf16>, vector<8x256xf32> -> vector<8x256xf32>
    %c3_44 = arith.constant 3 : index
    %c0_45 = arith.constant 0 : index
    %c0_46 = arith.constant 0 : index
    %61 = vector.load %arg5[%c3_44, %c0_45, %c0_46] : memref<5x8x256xf32, #tpu.memory_space<vmem>>, vector<1x8x256xf32>
    %62 = vector.shape_cast %61 : vector<1x8x256xf32> to vector<8x256xf32>
    %63 = arith.cmpf ogt, %60, %62 : vector<8x256xf32>
    %cst_47 = arith.constant 1.000000e+00 : f32
    %cst_48 = arith.constant 0.000000e+00 : f32
    %64 = vector.broadcast %cst_47 : f32 to vector<8x256xf32>
    %65 = vector.broadcast %cst_48 : f32 to vector<8x256xf32>
    %66 = arith.select %63, %64, %65 : vector<8x256xi1>, vector<8x256xf32>
    %67 = arith.truncf %66 : vector<8x256xf32> to vector<8x256xbf16>
    %cst_49 = arith.constant dense<0.000000e+00> : vector<8x128xf32>
    %68 = tpu.matmul %67, %0, %cst_49 {dimension_numbers = #tpu.dot_dimension_numbers<[1], [0], [0], [1], [0, 0, 1, 1], [], []>} : vector<8x256xbf16>, vector<256x128xbf16>, vector<8x128xf32> -> vector<8x128xf32>
    %c4 = arith.constant 4 : index
    %c0_50 = arith.constant 0 : index
    %c0_51 = arith.constant 0 : index
    %69 = vector.load %arg4[%c4, %c0_50, %c0_51] : memref<6x8x128xf32, #tpu.memory_space<vmem>>, vector<1x8x128xf32>
    %70 = vector.shape_cast %69 : vector<1x8x128xf32> to vector<8x128xf32>
    %71 = arith.cmpf ogt, %68, %70 : vector<8x128xf32>
    %cst_52 = arith.constant 1.000000e+00 : f32
    %cst_53 = arith.constant 0.000000e+00 : f32
    %72 = vector.broadcast %cst_52 : f32 to vector<8x128xf32>
    %73 = vector.broadcast %cst_53 : f32 to vector<8x128xf32>
    %74 = arith.select %71, %72, %73 : vector<8x128xi1>, vector<8x128xf32>
    %75 = arith.truncf %74 : vector<8x128xf32> to vector<8x128xbf16>
    %cst_54 = arith.constant dense<0.000000e+00> : vector<8x256xf32>
    %76 = tpu.matmul %75, %1, %cst_54 {dimension_numbers = #tpu.dot_dimension_numbers<[1], [0], [0], [1], [0, 0, 1, 1], [], []>} : vector<8x128xbf16>, vector<128x256xbf16>, vector<8x256xf32> -> vector<8x256xf32>
    %c4_55 = arith.constant 4 : index
    %c0_56 = arith.constant 0 : index
    %c0_57 = arith.constant 0 : index
    %77 = vector.load %arg5[%c4_55, %c0_56, %c0_57] : memref<5x8x256xf32, #tpu.memory_space<vmem>>, vector<1x8x256xf32>
    %78 = vector.shape_cast %77 : vector<1x8x256xf32> to vector<8x256xf32>
    %79 = arith.cmpf ogt, %76, %78 : vector<8x256xf32>
    %cst_58 = arith.constant 1.000000e+00 : f32
    %cst_59 = arith.constant 0.000000e+00 : f32
    %80 = vector.broadcast %cst_58 : f32 to vector<8x256xf32>
    %81 = vector.broadcast %cst_59 : f32 to vector<8x256xf32>
    %82 = arith.select %79, %80, %81 : vector<8x256xi1>, vector<8x256xf32>
    %83 = arith.truncf %82 : vector<8x256xf32> to vector<8x256xbf16>
    %84 = arith.extf %83 : vector<8x256xbf16> to vector<8x256xf32>
    %c0_60 = arith.constant 0 : index
    %c0_61 = arith.constant 0 : index
    %85 = vector.load %arg6[%c0_60, %c0_61] : memref<8x256xf32, #tpu.memory_space<vmem>>, vector<8x256xf32>
    tpu.vector_store %arg6[%c0_60, %c0_61], %84 {strides = array<i32>} : memref<8x256xf32, #tpu.memory_space<vmem>>, vector<8x256xf32>,
    return
  }
  func.func @transform_0(%arg0: i32) -> (i32, i32) {
    %c0_i32 = arith.constant 0 : i32
    %c0_i32_0 = arith.constant 0 : i32
    return %arg0, %c0_i32 : i32, i32
  }
  func.func @transform_1(%arg0: i32) -> (i32, i32) {
    %c0_i32 = arith.constant 0 : i32
    %c0_i32_0 = arith.constant 0 : i32
    %c0_i32_1 = arith.constant 0 : i32
    return %c0_i32, %c0_i32_0 : i32, i32
  }
  func.func @transform_2(%arg0: i32) -> (i32, i32) {
    %c0_i32 = arith.constant 0 : i32
    %c0_i32_0 = arith.constant 0 : i32
    %c0_i32_1 = arith.constant 0 : i32
    return %c0_i32, %c0_i32_0 : i32, i32
  }
  func.func @transform_3(%arg0: i32) -> (i32, i32, i32) {
    %c0_i32 = arith.constant 0 : i32
    %c0_i32_0 = arith.constant 0 : i32
    %c0_i32_1 = arith.constant 0 : i32
    return %c0_i32, %arg0, %c0_i32_0 : i32, i32, i32
  }
  func.func @transform_4(%arg0: i32) -> (i32, i32, i32) {
    %c0_i32 = arith.constant 0 : i32
    %c0_i32_0 = arith.constant 0 : i32
    %c0_i32_1 = arith.constant 0 : i32
    return %c0_i32, %arg0, %c0_i32_0 : i32, i32, i32
  }
  func.func @transform_5(%arg0: i32) -> (i32, i32) {
    %c0_i32 = arith.constant 0 : i32
    %c0_i32_0 = arith.constant 0 : i32
    return %arg0, %c0_i32 : i32, i32
  }
}

</mosaic_0001>

<llo_original>
// kernel: tpu_custom_call.1
$region0: #{tpu_custom_call.1}
  #allocation0 [shape = 'u32[]', space=smem, size = 0x4, offset = 0x4, fixed_abs, tag = 'smem constant byte address 0x4 - core index']
  #allocation1 [shape = 'u32[144,128]{1,0:T(1,128)}', space=vmem, size = 0x12000, scoped, tag = 'internal scratch']
  %s0 = inlined_call_operand.hbm [shape: f32[8,256], index: 0, kind: input, shape index: {}]
  %s1 = inlined_call_operand.hbm [shape: bf16[256,128], index: 1, kind: input, shape index: {}]
  %s2 = inlined_call_operand.hbm [shape: bf16[128,256], index: 2, kind: input, shape index: {}]
  %s3 = inlined_call_operand.hbm [shape: f32[6,8,128], index: 3, kind: input, shape index: {}]
  %s4 = inlined_call_operand.hbm [shape: f32[5,8,256], index: 4, kind: input, shape index: {}]
  %s5 = inlined_call_operand.hbm [shape: f32[8,256], index: 5, kind: output, shape index: {}]
  %s6 = sld [smem:[#allocation0]]
  $region50: #{tpu_custom_call.1} parent=0
    _
  %s8 = ssub.s32 1, %s6
  %s9 = scalar_select 0, %s8, %s6
  $region1: #{tpu_custom_call.1} parent=0
    #allocation2 [shape = 'u8[8192]{0}', space=vmem, size = 0x2000, scoped, tag = 'input window, operand 0, single buffered']
    #allocation3 [shape = 's32[1]{0}', space=sflag, size = 0x4, scoped, tag = 'scoped memory for tpu_custom_call.1']
    #allocation4 [shape = 's32[1]{0}', space=sflag, size = 0x4, scoped, tag = 'scoped memory for tpu_custom_call.1']
    #allocation5 [shape = 'u8[65536]{0}', space=vmem, size = 0x10000, scoped, tag = 'input window, operand 1, single buffered']
    #allocation6 [shape = 's32[1]{0}', space=sflag, size = 0x4, scoped, tag = 'scoped memory for tpu_custom_call.1']
    #allocation7 [shape = 'u8[65536]{0}', space=vmem, size = 0x10000, scoped, tag = 'input window, operand 2, single buffered']
    #allocation8 [shape = 'u8[24576]{0}', space=vmem, size = 0x6000, scoped, tag = 'input window, operand 3, single buffered']
    #allocation9 [shape = 's32[1]{0}', space=sflag, size = 0x4, scoped, tag = 'scoped memory for tpu_custom_call.1']
    #allocation10 [shape = 'u8[40960]{0}', space=vmem, size = 0xa000, scoped, tag = 'input window, operand 4, single buffered']
    #allocation11 [shape = 'u8[8192]{0}', space=vmem, size = 0x2000, scoped, tag = 'output window, operand 0, single buffered']
    %10 = vsyncpa [#allocation3], 0
    %11 = vsyncpa [#allocation6], 0
    %12 = vsyncpa [#allocation9], 0
    %13 = vsyncpa [#allocation4], 0
    // Predicated region
    $region2: #{tpu_custom_call.1} parent=1 // pred_check
      _
    $region3: #{tpu_custom_call.1} parent=1 // pred_check_branch
      %15 = sbr.rel (0) target = $region5
    $region4: #{tpu_custom_call.1} parent=1 // pred_region
      %s17 = ssub.s32 256, 256
      %18 = vsyncadd [#allocation3], %s17
      %s20 = sshll.u32 [#allocation2], 4
      %s21 = int_to_ptr.vmem [resolvable:$true] %s20
      %23 = dma.hbm_to_vmem [thread:$0]  %s0, 256, %s21, [#allocation3]
    $region5: #{tpu_custom_call.1} parent=1 // pred_fallthru
      _
    // Predicated region
    $region6: #{tpu_custom_call.1} parent=1 // pred_check
      _
    $region7: #{tpu_custom_call.1} parent=1 // pred_check_branch
      %25 = sbr.rel (0) target = $region9
    $region8: #{tpu_custom_call.1} parent=1 // pred_region
      %s27 = ssub.s32 2048, 2048
      %28 = vsyncadd [#allocation6], %s27
      %s29 = sshll.u32 [#allocation5], 4
      %s30 = int_to_ptr.vmem [resolvable:$true] %s29
      %35 = dma.hbm_to_vmem [thread:$0]  %s1, 2048, %s30, [#allocation6], 64, 64, 4
    $region9: #{tpu_custom_call.1} parent=1 // pred_fallthru
      _
    // Predicated region
    $region10: #{tpu_custom_call.1} parent=1 // pred_check
      _
    $region11: #{tpu_custom_call.1} parent=1 // pred_check_branch
      %37 = sbr.rel (0) target = $region13
    $region12: #{tpu_custom_call.1} parent=1 // pred_region
      %s39 = ssub.s32 2048, 2048
      %40 = vsyncadd [#allocation6], %s39
      %s41 = sshll.u32 [#allocation7], 4
      %s42 = int_to_ptr.vmem [resolvable:$true] %s41
      %47 = dma.hbm_to_vmem [thread:$0]  %s2, 2048, %s42, [#allocation6], 128, 128, 8
    $region13: #{tpu_custom_call.1} parent=1 // pred_fallthru
      _
    // Predicated region
    $region14: #{tpu_custom_call.1} parent=1 // pred_check
      _
    $region15: #{tpu_custom_call.1} parent=1 // pred_check_branch
      %49 = sbr.rel (0) target = $region17
    $region16: #{tpu_custom_call.1} parent=1 // pred_region
      %s51 = ssub.s32 768, 768
      %52 = vsyncadd [#allocation9], %s51
      %s53 = sshll.u32 [#allocation8], 4
      %s54 = int_to_ptr.vmem [resolvable:$true] %s53
      %59 = dma.hbm_to_vmem [thread:$0]  %s3, 768, %s54, [#allocation9], 128, 128, 8
    $region17: #{tpu_custom_call.1} parent=1 // pred_fallthru
      _
    // Predicated region
    $region18: #{tpu_custom_call.1} parent=1 // pred_check
      _
    $region19: #{tpu_custom_call.1} parent=1 // pred_check_branch
      %61 = sbr.rel (0) target = $region21
    $region20: #{tpu_custom_call.1} parent=1 // pred_region
      %s63 = ssub.s32 1280, 1280
      %64 = vsyncadd [#allocation9], %s63
      %s65 = sshll.u32 [#allocation10], 4
      %s66 = int_to_ptr.vmem [resolvable:$true] %s65
      %71 = dma.hbm_to_vmem [thread:$0]  %s4, 1280, %s66, [#allocation9], 256, 256, 16
    $region21: #{tpu_custom_call.1} parent=1 // pred_fallthru
      _
    // Predicated region
    $region22: #{tpu_custom_call.1} parent=1 // pred_check
      _
    $region23: #{tpu_custom_call.1} parent=1 // pred_check_branch
      %73 = sbr.rel (0) target = $region25
    $region24: #{tpu_custom_call.1} parent=1 // pred_region
      %74 = dma.done [#allocation3], 256
    $region25: #{tpu_custom_call.1} parent=1 // pred_fallthru
      _
    // Predicated region
    $region26: #{tpu_custom_call.1} parent=1 // pred_check
      _
    $region27: #{tpu_custom_call.1} parent=1 // pred_check_branch
      %76 = sbr.rel (0) target = $region29
    $region28: #{tpu_custom_call.1} parent=1 // pred_region
      %77 = dma.done [#allocation6], 2048
    $region29: #{tpu_custom_call.1} parent=1 // pred_fallthru
      _
    // Predicated region
    $region30: #{tpu_custom_call.1} parent=1 // pred_check
      _
    $region31: #{tpu_custom_call.1} parent=1 // pred_check_branch
      %79 = sbr.rel (0) target = $region33
    $region32: #{tpu_custom_call.1} parent=1 // pred_region
      %80 = dma.done [#allocation6], 2048
    $region33: #{tpu_custom_call.1} parent=1 // pred_fallthru
      _
    // Predicated region
    $region34: #{tpu_custom_call.1} parent=1 // pred_check
      _
    $region35: #{tpu_custom_call.1} parent=1 // pred_check_branch
      %82 = sbr.rel (0) target = $region37
    $region36: #{tpu_custom_call.1} parent=1 // pred_region
      %83 = dma.done [#allocation9], 768
    $region37: #{tpu_custom_call.1} parent=1 // pred_fallthru
      _
    // Predicated region
    $region38: #{tpu_custom_call.1} parent=1 // pred_check
      _
    $region39: #{tpu_custom_call.1} parent=1 // pred_check_branch
      %85 = sbr.rel (0) target = $region41
    $region40: #{tpu_custom_call.1} parent=1 // pred_region
      %86 = dma.done [#allocation9], 1280
    $region41: #{tpu_custom_call.1} parent=1 // pred_fallthru
      _
    %v88 = vld [vmem:[#allocation5] sm:$0xf]
    %v89 = vld [vmem:[#allocation5 + $0x4] sm:$0xf]
    %v90 = vld [vmem:[#allocation5 + $0x8] sm:$0xf]
    %v91 = vld [vmem:[#allocation5 + $0xc] sm:$0xf]
    %v92 = vld [vmem:[#allocation5 + $0x10] sm:$0xf]
    %v93 = vld [vmem:[#allocation5 + $0x14] sm:$0xf]
    %v94 = vld [vmem:[#allocation5 + $0x18] sm:$0xf]
    %v95 = vld [vmem:[#allocation5 + $0x1c] sm:$0xf]
    %v96 = vld [vmem:[#allocation5 + $0x20] sm:$0xf]
    %v97 = vld [vmem:[#allocation5 + $0x24] sm:$0xf]
    %v98 = vld [vmem:[#allocation5 + $0x28] sm:$0xf]
    %v99 = vld [vmem:[#allocation5 + $0x2c] sm:$0xf]
    %v100 = vld [vmem:[#allocation5 + $0x30] sm:$0xf]
    %v101 = vld [vmem:[#allocation5 + $0x34] sm:$0xf]
    %v102 = vld [vmem:[#allocation5 + $0x38] sm:$0xf]
    %v103 = vld [vmem:[#allocation5 + $0x3c] sm:$0xf]
    %v104 = vld [vmem:[#allocation5 + $0x40] sm:$0xf]
    %v105 = vld [vmem:[#allocation5 + $0x44] sm:$0xf]
    %v106 = vld [vmem:[#allocation5 + $0x48] sm:$0xf]
    %v107 = vld [vmem:[#allocation5 + $0x4c] sm:$0xf]
    %v108 = vld [vmem:[#allocation5 + $0x50] sm:$0xf]
    %v109 = vld [vmem:[#allocation5 + $0x54] sm:$0xf]
    %v110 = vld [vmem:[#allocation5 + $0x58] sm:$0xf]
    %v111 = vld [vmem:[#allocation5 + $0x5c] sm:$0xf]
    %v112 = vld [vmem:[#allocation5 + $0x60] sm:$0xf]
    %v113 = vld [vmem:[#allocation5 + $0x64] sm:$0xf]
    %v114 = vld [vmem:[#allocation5 + $0x68] sm:$0xf]
    %v115 = vld [vmem:[#allocation5 + $0x6c] sm:$0xf]
    %v116 = vld [vmem:[#allocation5 + $0x70] sm:$0xf]
    %v117 = vld [vmem:[#allocation5 + $0x74] sm:$0xf]
    %v118 = vld [vmem:[#allocation5 + $0x78] sm:$0xf]
    %v119 = vld [vmem:[#allocation5 + $0x7c] sm:$0xf]
    %v120 = vld [vmem:[#allocation7] sm:$0xff]
    %v121 = vld [vmem:[#allocation7 + $0x8] sm:$0xff]
    %v122 = vld [vmem:[#allocation7 + $0x10] sm:$0xff]
    %v123 = vld [vmem:[#allocation7 + $0x18] sm:$0xff]
    %v124 = vld [vmem:[#allocation7 + $0x20] sm:$0xff]
    %v125 = vld [vmem:[#allocation7 + $0x28] sm:$0xff]
    %v126 = vld [vmem:[#allocation7 + $0x30] sm:$0xff]
    %v127 = vld [vmem:[#allocation7 + $0x38] sm:$0xff]
    %v128 = vld [vmem:[#allocation7 + $0x40] sm:$0xff]
    %v129 = vld [vmem:[#allocation7 + $0x48] sm:$0xff]
    %v130 = vld [vmem:[#allocation7 + $0x50] sm:$0xff]
    %v131 = vld [vmem:[#allocation7 + $0x58] sm:$0xff]
    %v132 = vld [vmem:[#allocation7 + $0x60] sm:$0xff]
    %v133 = vld [vmem:[#allocation7 + $0x68] sm:$0xff]
    %v134 = vld [vmem:[#allocation7 + $0x70] sm:$0xff]
    %v135 = vld [vmem:[#allocation7 + $0x78] sm:$0xff]
    %v136 = vld [vmem:[#allocation2] sm:$0xff]
    %v137 = vld [vmem:[#allocation2 + $0x8] sm:$0xff]
    %v138 = vpack.c.bf16 %v136, %v136
    %v139 = vpack.c.bf16 %v137, %v137
    %v172 = vunpack.c.l.b16 %v88
    %v173 = vunpack.c.l.b16 %v89
    %v174 = vunpack.c.l.b16 %v90
    %v175 = vunpack.c.l.b16 %v91
    %v176 = vunpack.c.l.b16 %v92
    %v177 = vunpack.c.l.b16 %v93
    %v178 = vunpack.c.l.b16 %v94
    %v179 = vunpack.c.l.b16 %v95
    %v180 = vunpack.c.l.b16 %v96
    %v181 = vunpack.c.l.b16 %v97
    %v182 = vunpack.c.l.b16 %v98
    %v183 = vunpack.c.l.b16 %v99
    %v184 = vunpack.c.l.b16 %v100
    %v185 = vunpack.c.l.b16 %v101
    %v186 = vunpack.c.l.b16 %v102
    %v187 = vunpack.c.l.b16 %v103
    %v188 = vunpack.c.l.b16 %v104
    %v189 = vunpack.c.l.b16 %v105
    %v190 = vunpack.c.l.b16 %v106
    %v191 = vunpack.c.l.b16 %v107
    %v192 = vunpack.c.l.b16 %v108
    %v193 = vunpack.c.l.b16 %v109
    %v194 = vunpack.c.l.b16 %v110
    %v195 = vunpack.c.l.b16 %v111
    %v196 = vunpack.c.l.b16 %v112
    %v197 = vunpack.c.l.b16 %v113
    %v198 = vunpack.c.l.b16 %v114
    %v199 = vunpack.c.l.b16 %v115
    %v200 = vunpack.c.l.b16 %v116
    %v201 = vunpack.c.l.b16 %v117
    %v202 = vunpack.c.l.b16 %v118
    %v203 = vunpack.c.l.b16 %v119
    %v204 = vpack.c.b16 %v173, %v172
    %v205 = vpack.c.b16 %v175, %v174
    %v206 = vpack.c.b16 %v177, %v176
    %v207 = vpack.c.b16 %v179, %v178
    %v208 = vpack.c.b16 %v181, %v180
    %v209 = vpack.c.b16 %v183, %v182
    %v210 = vpack.c.b16 %v185, %v184
    %v211 = vpack.c.b16 %v187, %v186
    %v212 = vpack.c.b16 %v189, %v188
    %v213 = vpack.c.b16 %v191, %v190
    %v214 = vpack.c.b16 %v193, %v192
    %v215 = vpack.c.b16 %v195, %v194
    %v216 = vpack.c.b16 %v197, %v196
    %v217 = vpack.c.b16 %v199, %v198
    %v218 = vpack.c.b16 %v201, %v200
    %v219 = vpack.c.b16 %v203, %v202
    %236 = vmatprep.subr.bf16.mxu0 0
    %237 = vmatpush1.bf16.msra.mxu0 %v211
    %238 = vmatprep.subr.bf16.mxu0 0
    %239 = vmatpush1.bf16.msra.mxu0 %v210
    %240 = vmatprep.subr.bf16.mxu0 0
    %241 = vmatpush1.bf16.msra.mxu0 %v209
    %242 = vmatprep.subr.bf16.mxu0 0
    %243 = vmatpush1.bf16.msra.mxu0 %v208
    %244 = vmatprep.subr.bf16.mxu0 0
    %245 = vmatpush1.bf16.msra.mxu0 %v207
    %246 = vmatprep.subr.bf16.mxu0 0
    %247 = vmatpush1.bf16.msra.mxu0 %v206
    %248 = vmatprep.subr.bf16.mxu0 0
    %249 = vmatpush1.bf16.msra.mxu0 %v205
    %250 = vmatprep.subr.bf16.mxu0 0
    %251 = vmatpush1.bf16.msra.mxu0 %v204
    %252 = vmatprep.subr.bf16.mxu0 0
    %253 = vmatpush2.bf16.msra.mxu0 %v219
    %254 = vmatprep.subr.bf16.mxu0 0
    %255 = vmatpush2.bf16.msra.mxu0 %v218
    %256 = vmatprep.subr.bf16.mxu0 0
    %257 = vmatpush2.bf16.msra.mxu0 %v217
    %258 = vmatprep.subr.bf16.mxu0 0
    %259 = vmatpush2.bf16.msra.mxu0 %v216
    %260 = vmatprep.subr.bf16.mxu0 0
    %261 = vmatpush2.bf16.msra.mxu0 %v215
    %262 = vmatprep.subr.bf16.mxu0 0
    %263 = vmatpush2.bf16.msra.mxu0 %v214
    %264 = vmatprep.subr.bf16.mxu0 0
    %265 = vmatpush2.bf16.msra.mxu0 %v213
    %266 = vmatprep.subr.bf16.mxu0 0
    %267 = vmatpush2.bf16.msra.mxu0 %v212
    %268 = vmatprep.mubr.bf16.mxu0 %v139
    %269 = vmatmul.mubr.bf16.gmra.mxu0 %v138
    %v270 = vpop.f32.mrf.mxu0
    %v271 = vadd.f32 0.0, %v270
    %v272 = vpop.f32.mrf.mxu0
    %v273 = vpop.f32.mrf.mxu0
    %v274 = vpop.f32.mrf.mxu0
    %275 = vdwg.mxu0
    %v276 = vld [vmem:[#allocation8] sm:$0xff]
    %vm277 = vcmp.gt.f32.partialorder %v271, %v276
    %v278 = vsel %vm277, 1.0, 0.0
    %v279 = vpack.c.bf16 %v278, %v278
    %v296 = vunpack.c.l.b16 %v120
    %v297 = vunpack.c.h.b16 %v120
    %v298 = vunpack.c.l.b16 %v121
    %v299 = vunpack.c.h.b16 %v121
    %v300 = vunpack.c.l.b16 %v122
    %v301 = vunpack.c.h.b16 %v122
    %v302 = vunpack.c.l.b16 %v123
    %v303 = vunpack.c.h.b16 %v123
    %v304 = vunpack.c.l.b16 %v124
    %v305 = vunpack.c.h.b16 %v124
    %v306 = vunpack.c.l.b16 %v125
    %v307 = vunpack.c.h.b16 %v125
    %v308 = vunpack.c.l.b16 %v126
    %v309 = vunpack.c.h.b16 %v126
    %v310 = vunpack.c.l.b16 %v127
    %v311 = vunpack.c.h.b16 %v127
    %v312 = vunpack.c.l.b16 %v128
    %v313 = vunpack.c.h.b16 %v128
    %v314 = vunpack.c.l.b16 %v129
    %v315 = vunpack.c.h.b16 %v129
    %v316 = vunpack.c.l.b16 %v130
    %v317 = vunpack.c.h.b16 %v130
    %v318 = vunpack.c.l.b16 %v131
    %v319 = vunpack.c.h.b16 %v131
    %v320 = vunpack.c.l.b16 %v132
    %v321 = vunpack.c.h.b16 %v132
    %v322 = vunpack.c.l.b16 %v133
    %v323 = vunpack.c.h.b16 %v133
    %v324 = vunpack.c.l.b16 %v134
    %v325 = vunpack.c.h.b16 %v134
    %v326 = vunpack.c.l.b16 %v135
    %v327 = vunpack.c.h.b16 %v135
    %v328 = vpack.c.b16 %v298, %v296
    %v329 = vpack.c.b16 %v299, %v297
    %v330 = vpack.c.b16 %v302, %v300
    %v331 = vpack.c.b16 %v303, %v301
    %v332 = vpack.c.b16 %v306, %v304
    %v333 = vpack.c.b16 %v307, %v305
    %v334 = vpack.c.b16 %v310, %v308
    %v335 = vpack.c.b16 %v311, %v309
    %v336 = vpack.c.b16 %v314, %v312
    %v337 = vpack.c.b16 %v315, %v313
    %v338 = vpack.c.b16 %v318, %v316
    %v339 = vpack.c.b16 %v319, %v317
    %v340 = vpack.c.b16 %v322, %v320
    %v341 = vpack.c.b16 %v323, %v321
    %v342 = vpack.c.b16 %v326, %v324
    %v343 = vpack.c.b16 %v327, %v325
    %360 = vmatprep.subr.bf16.mxu0 %v343
    %361 = vmatpush1.bf16.msra.mxu0 %v342
    %362 = vmatprep.subr.bf16.mxu0 %v341
    %363 = vmatpush1.bf16.msra.mxu0 %v340
    %364 = vmatprep.subr.bf16.mxu0 %v339
    %365 = vmatpush1.bf16.msra.mxu0 %v338
    %366 = vmatprep.subr.bf16.mxu0 %v337
    %367 = vmatpush1.bf16.msra.mxu0 %v336
    %368 = vmatprep.subr.bf16.mxu0 %v335
    %369 = vmatpush1.bf16.msra.mxu0 %v334
    %370 = vmatprep.subr.bf16.mxu0 %v333
    %371 = vmatpush1.bf16.msra.mxu0 %v332
    %372 = vmatprep.subr.bf16.mxu0 %v331
    %373 = vmatpush1.bf16.msra.mxu0 %v330
    %374 = vmatprep.subr.bf16.mxu0 %v329
    %375 = vmatpush1.bf16.msra.mxu0 %v328
    %376 = vmatprep.subr.bf16.mxu0 0
    %377 = vmatpush2.bf16.msra.mxu0 0
    %378 = vmatprep.subr.bf16.mxu0 0
    %379 = vmatpush2.bf16.msra.mxu0 0
    %380 = vmatprep.subr.bf16.mxu0 0
    %381 = vmatpush2.bf16.msra.mxu0 0
    %382 = vmatprep.subr.bf16.mxu0 0
    %383 = vmatpush2.bf16.msra.mxu0 0
    %384 = vmatprep.subr.bf16.mxu0 0
    %385 = vmatpush2.bf16.msra.mxu0 0
    %386 = vmatprep.subr.bf16.mxu0 0
    %387 = vmatpush2.bf16.msra.mxu0 0
    %388 = vmatprep.subr.bf16.mxu0 0
    %389 = vmatpush2.bf16.msra.mxu0 0
    %390 = vmatprep.subr.bf16.mxu0 0
    %391 = vmatpush2.bf16.msra.mxu0 0
    %392 = vmatprep.mubr.bf16.mxu0 0
    %393 = vmatmul.mubr.bf16.gmra.mxu0 %v279
    %v394 = vpop.f32.mrf.mxu0
    %v395 = vadd.f32 0.0, %v394
    %v396 = vpop.f32.mrf.mxu0
    %v397 = vadd.f32 0.0, %v396
    %v398 = vpop.f32.mrf.mxu0
    %v399 = vpop.f32.mrf.mxu0
    %400 = vdwg.mxu0
    %v401 = vld [vmem:[#allocation10] sm:$0xff]
    %v402 = vld [vmem:[#allocation10 + $0x8] sm:$0xff]
    %vm403 = vcmp.gt.f32.partialorder %v395, %v401
    %vm404 = vcmp.gt.f32.partialorder %v397, %v402
    %v405 = vsel %vm403, 1.0, 0.0
    %v406 = vsel %vm404, 1.0, 0.0
    %v407 = vpack.c.bf16 %v405, %v405
    %v408 = vpack.c.bf16 %v406, %v406
    %409 = vmatprep.subr.bf16.mxu0 0
    %410 = vmatpush1.bf16.msra.mxu0 %v211
    %411 = vmatprep.subr.bf16.mxu0 0
    %412 = vmatpush1.bf16.msra.mxu0 %v210
    %413 = vmatprep.subr.bf16.mxu0 0
    %414 = vmatpush1.bf16.msra.mxu0 %v209
    %415 = vmatprep.subr.bf16.mxu0 0
    %416 = vmatpush1.bf16.msra.mxu0 %v208
    %417 = vmatprep.subr.bf16.mxu0 0
    %418 = vmatpush1.bf16.msra.mxu0 %v207
    %419 = vmatprep.subr.bf16.mxu0 0
    %420 = vmatpush1.bf16.msra.mxu0 %v206
    %421 = vmatprep.subr.bf16.mxu0 0
    %422 = vmatpush1.bf16.msra.mxu0 %v205
    %423 = vmatprep.subr.bf16.mxu0 0
    %424 = vmatpush1.bf16.msra.mxu0 %v204
    %425 = vmatprep.subr.bf16.mxu0 0
    %426 = vmatpush2.bf16.msra.mxu0 %v219
    %427 = vmatprep.subr.bf16.mxu0 0
    %428 = vmatpush2.bf16.msra.mxu0 %v218
    %429 = vmatprep.subr.bf16.mxu0 0
    %430 = vmatpush2.bf16.msra.mxu0 %v217
    %431 = vmatprep.subr.bf16.mxu0 0
    %432 = vmatpush2.bf16.msra.mxu0 %v216
    %433 = vmatprep.subr.bf16.mxu0 0
    %434 = vmatpush2.bf16.msra.mxu0 %v215
    %435 = vmatprep.subr.bf16.mxu0 0
    %436 = vmatpush2.bf16.msra.mxu0 %v214
    %437 = vmatprep.subr.bf16.mxu0 0
    %438 = vmatpush2.bf16.msra.mxu0 %v213
    %439 = vmatprep.subr.bf16.mxu0 0
    %440 = vmatpush2.bf16.msra.mxu0 %v212
    %441 = vmatprep.mubr.bf16.mxu0 %v408
    %442 = vmatmul.mubr.bf16.gmra.mxu0 %v407
    %v443 = vpop.f32.mrf.mxu0
    %v444 = vadd.f32 0.0, %v443
    %v445 = vpop.f32.mrf.mxu0
    %v446 = vpop.f32.mrf.mxu0
    %v447 = vpop.f32.mrf.mxu0
    %448 = vdwg.mxu0
    %s449 = scalar_lea.vmem [#allocation8], 8
    %v450 = vld [vmem:[%s449] sm:$0xff]
    %vm451 = vcmp.gt.f32.partialorder %v444, %v450
    %v452 = vsel %vm451, 1.0, 0.0
    %v453 = vpack.c.bf16 %v452, %v452
    %454 = vmatprep.subr.bf16.mxu0 %v343
    %455 = vmatpush1.bf16.msra.mxu0 %v342
    %456 = vmatprep.subr.bf16.mxu0 %v341
    %457 = vmatpush1.bf16.msra.mxu0 %v340
    %458 = vmatprep.subr.bf16.mxu0 %v339
    %459 = vmatpush1.bf16.msra.mxu0 %v338
    %460 = vmatprep.subr.bf16.mxu0 %v337
    %461 = vmatpush1.bf16.msra.mxu0 %v336
    %462 = vmatprep.subr.bf16.mxu0 %v335
    %463 = vmatpush1.bf16.msra.mxu0 %v334
    %464 = vmatprep.subr.bf16.mxu0 %v333
    %465 = vmatpush1.bf16.msra.mxu0 %v332
    %466 = vmatprep.subr.bf16.mxu0 %v331
    %467 = vmatpush1.bf16.msra.mxu0 %v330
    %468 = vmatprep.subr.bf16.mxu0 %v329
    %469 = vmatpush1.bf16.msra.mxu0 %v328
    %470 = vmatprep.subr.bf16.mxu0 0
    %471 = vmatpush2.bf16.msra.mxu0 0
    %472 = vmatprep.subr.bf16.mxu0 0
    %473 = vmatpush2.bf16.msra.mxu0 0
    %474 = vmatprep.subr.bf16.mxu0 0
    %475 = vmatpush2.bf16.msra.mxu0 0
    %476 = vmatprep.subr.bf16.mxu0 0
    %477 = vmatpush2.bf16.msra.mxu0 0
    %478 = vmatprep.subr.bf16.mxu0 0
    %479 = vmatpush2.bf16.msra.mxu0 0
    %480 = vmatprep.subr.bf16.mxu0 0
    %481 = vmatpush2.bf16.msra.mxu0 0
    %482 = vmatprep.subr.bf16.mxu0 0
    %483 = vmatpush2.bf16.msra.mxu0 0
    %484 = vmatprep.subr.bf16.mxu0 0
    %485 = vmatpush2.bf16.msra.mxu0 0
    %486 = vmatprep.mubr.bf16.mxu0 0
    %487 = vmatmul.mubr.bf16.gmra.mxu0 %v453
    %v488 = vpop.f32.mrf.mxu0
    %v489 = vadd.f32 0.0, %v488
    %v490 = vpop.f32.mrf.mxu0
    %v491 = vadd.f32 0.0, %v490
    %v492 = vpop.f32.mrf.mxu0
    %v493 = vpop.f32.mrf.mxu0
    %494 = vdwg.mxu0
    %s495 = scalar_lea.vmem [#allocation10], 16
    %v496 = vld [vmem:[%s495] sm:$0xff]
    %v497 = vld [vmem:[%s495 + $0x8] sm:$0xff]
    %vm498 = vcmp.gt.f32.partialorder %v489, %v496
    %vm499 = vcmp.gt.f32.partialorder %v491, %v497
    %v500 = vsel %vm498, 1.0, 0.0
    %v501 = vsel %vm499, 1.0, 0.0
    %v502 = vpack.c.bf16 %v500, %v500
    %v503 = vpack.c.bf16 %v501, %v501
    %504 = vmatprep.subr.bf16.mxu0 0
    %505 = vmatpush1.bf16.msra.mxu0 %v211
    %506 = vmatprep.subr.bf16.mxu0 0
    %507 = vmatpush1.bf16.msra.mxu0 %v210
    %508 = vmatprep.subr.bf16.mxu0 0
    %509 = vmatpush1.bf16.msra.mxu0 %v209
    %510 = vmatprep.subr.bf16.mxu0 0
    %511 = vmatpush1.bf16.msra.mxu0 %v208
    %512 = vmatprep.subr.bf16.mxu0 0
    %513 = vmatpush1.bf16.msra.mxu0 %v207
    %514 = vmatprep.subr.bf16.mxu0 0
    %515 = vmatpush1.bf16.msra.mxu0 %v206
    %516 = vmatprep.subr.bf16.mxu0 0
    %517 = vmatpush1.bf16.msra.mxu0 %v205
    %518 = vmatprep.subr.bf16.mxu0 0
    %519 = vmatpush1.bf16.msra.mxu0 %v204
    %520 = vmatprep.subr.bf16.mxu0 0
    %521 = vmatpush2.bf16.msra.mxu0 %v219
    %522 = vmatprep.subr.bf16.mxu0 0
    %523 = vmatpush2.bf16.msra.mxu0 %v218
    %524 = vmatprep.subr.bf16.mxu0 0
    %525 = vmatpush2.bf16.msra.mxu0 %v217
    %526 = vmatprep.subr.bf16.mxu0 0
    %527 = vmatpush2.bf16.msra.mxu0 %v216
    %528 = vmatprep.subr.bf16.mxu0 0
    %529 = vmatpush2.bf16.msra.mxu0 %v215
    %530 = vmatprep.subr.bf16.mxu0 0
    %531 = vmatpush2.bf16.msra.mxu0 %v214
    %532 = vmatprep.subr.bf16.mxu0 0
    %533 = vmatpush2.bf16.msra.mxu0 %v213
    %534 = vmatprep.subr.bf16.mxu0 0
    %535 = vmatpush2.bf16.msra.mxu0 %v212
    %536 = vmatprep.mubr.bf16.mxu0 %v503
    %537 = vmatmul.mubr.bf16.gmra.mxu0 %v502
    %v538 = vpop.f32.mrf.mxu0
    %v539 = vadd.f32 0.0, %v538
    %v540 = vpop.f32.mrf.mxu0
    %v541 = vpop.f32.mrf.mxu0
    %v542 = vpop.f32.mrf.mxu0
    %543 = vdwg.mxu0
    %s544 = scalar_lea.vmem [#allocation8], 16
    %v545 = vld [vmem:[%s544] sm:$0xff]
    %vm546 = vcmp.gt.f32.partialorder %v539, %v545
    %v547 = vsel %vm546, 1.0, 0.0
    %v548 = vpack.c.bf16 %v547, %v547
    %549 = vmatprep.subr.bf16.mxu0 %v343
    %550 = vmatpush1.bf16.msra.mxu0 %v342
    %551 = vmatprep.subr.bf16.mxu0 %v341
    %552 = vmatpush1.bf16.msra.mxu0 %v340
    %553 = vmatprep.subr.bf16.mxu0 %v339
    %554 = vmatpush1.bf16.msra.mxu0 %v338
    %555 = vmatprep.subr.bf16.mxu0 %v337
    %556 = vmatpush1.bf16.msra.mxu0 %v336
    %557 = vmatprep.subr.bf16.mxu0 %v335
    %558 = vmatpush1.bf16.msra.mxu0 %v334
    %559 = vmatprep.subr.bf16.mxu0 %v333
    %560 = vmatpush1.bf16.msra.mxu0 %v332
    %561 = vmatprep.subr.bf16.mxu0 %v331
    %562 = vmatpush1.bf16.msra.mxu0 %v330
    %563 = vmatprep.subr.bf16.mxu0 %v329
    %564 = vmatpush1.bf16.msra.mxu0 %v328
    %565 = vmatprep.subr.bf16.mxu0 0
    %566 = vmatpush2.bf16.msra.mxu0 0
    %567 = vmatprep.subr.bf16.mxu0 0
    %568 = vmatpush2.bf16.msra.mxu0 0
    %569 = vmatprep.subr.bf16.mxu0 0
    %570 = vmatpush2.bf16.msra.mxu0 0
    %571 = vmatprep.subr.bf16.mxu0 0
    %572 = vmatpush2.bf16.msra.mxu0 0
    %573 = vmatprep.subr.bf16.mxu0 0
    %574 = vmatpush2.bf16.msra.mxu0 0
    %575 = vmatprep.subr.bf16.mxu0 0
    %576 = vmatpush2.bf16.msra.mxu0 0
    %577 = vmatprep.subr.bf16.mxu0 0
    %578 = vmatpush2.bf16.msra.mxu0 0
    %579 = vmatprep.subr.bf16.mxu0 0
    %580 = vmatpush2.bf16.msra.mxu0 0
    %581 = vmatprep.mubr.bf16.mxu0 0
    %582 = vmatmul.mubr.bf16.gmra.mxu0 %v548
    %v583 = vpop.f32.mrf.mxu0
    %v584 = vadd.f32 0.0, %v583
    %v585 = vpop.f32.mrf.mxu0
    %v586 = vadd.f32 0.0, %v585
    %v587 = vpop.f32.mrf.mxu0
    %v588 = vpop.f32.mrf.mxu0
    %589 = vdwg.mxu0
    %s590 = scalar_lea.vmem [#allocation10], 32
    %v591 = vld [vmem:[%s590] sm:$0xff]
    %v592 = vld [vmem:[%s590 + $0x8] sm:$0xff]
    %vm593 = vcmp.gt.f32.partialorder %v584, %v591
    %vm594 = vcmp.gt.f32.partialorder %v586, %v592
    %v595 = vsel %vm593, 1.0, 0.0
    %v596 = vsel %vm594, 1.0, 0.0
    %v597 = vpack.c.bf16 %v595, %v595
    %v598 = vpack.c.bf16 %v596, %v596
    %599 = vmatprep.subr.bf16.mxu0 0
    %600 = vmatpush1.bf16.msra.mxu0 %v211
    %601 = vmatprep.subr.bf16.mxu0 0
    %602 = vmatpush1.bf16.msra.mxu0 %v210
    %603 = vmatprep.subr.bf16.mxu0 0
    %604 = vmatpush1.bf16.msra.mxu0 %v209
    %605 = vmatprep.subr.bf16.mxu0 0
    %606 = vmatpush1.bf16.msra.mxu0 %v208
    %607 = vmatprep.subr.bf16.mxu0 0
    %608 = vmatpush1.bf16.msra.mxu0 %v207
    %609 = vmatprep.subr.bf16.mxu0 0
    %610 = vmatpush1.bf16.msra.mxu0 %v206
    %611 = vmatprep.subr.bf16.mxu0 0
    %612 = vmatpush1.bf16.msra.mxu0 %v205
    %613 = vmatprep.subr.bf16.mxu0 0
    %614 = vmatpush1.bf16.msra.mxu0 %v204
    %615 = vmatprep.subr.bf16.mxu0 0
    %616 = vmatpush2.bf16.msra.mxu0 %v219
    %617 = vmatprep.subr.bf16.mxu0 0
    %618 = vmatpush2.bf16.msra.mxu0 %v218
    %619 = vmatprep.subr.bf16.mxu0 0
    %620 = vmatpush2.bf16.msra.mxu0 %v217
    %621 = vmatprep.subr.bf16.mxu0 0
    %622 = vmatpush2.bf16.msra.mxu0 %v216
    %623 = vmatprep.subr.bf16.mxu0 0
    %624 = vmatpush2.bf16.msra.mxu0 %v215
    %625 = vmatprep.subr.bf16.mxu0 0
    %626 = vmatpush2.bf16.msra.mxu0 %v214
    %627 = vmatprep.subr.bf16.mxu0 0
    %628 = vmatpush2.bf16.msra.mxu0 %v213
    %629 = vmatprep.subr.bf16.mxu0 0
    %630 = vmatpush2.bf16.msra.mxu0 %v212
    %631 = vmatprep.mubr.bf16.mxu0 %v598
    %632 = vmatmul.mubr.bf16.gmra.mxu0 %v597
    %v633 = vpop.f32.mrf.mxu0
    %v634 = vadd.f32 0.0, %v633
    %v635 = vpop.f32.mrf.mxu0
    %v636 = vpop.f32.mrf.mxu0
    %v637 = vpop.f32.mrf.mxu0
    %638 = vdwg.mxu0
    %s639 = scalar_lea.vmem [#allocation8], 24
    %v640 = vld [vmem:[%s639] sm:$0xff]
    %vm641 = vcmp.gt.f32.partialorder %v634, %v640
    %v642 = vsel %vm641, 1.0, 0.0
    %v643 = vpack.c.bf16 %v642, %v642
    %644 = vmatprep.subr.bf16.mxu0 %v343
    %645 = vmatpush1.bf16.msra.mxu0 %v342
    %646 = vmatprep.subr.bf16.mxu0 %v341
    %647 = vmatpush1.bf16.msra.mxu0 %v340
    %648 = vmatprep.subr.bf16.mxu0 %v339
    %649 = vmatpush1.bf16.msra.mxu0 %v338
    %650 = vmatprep.subr.bf16.mxu0 %v337
    %651 = vmatpush1.bf16.msra.mxu0 %v336
    %652 = vmatprep.subr.bf16.mxu0 %v335
    %653 = vmatpush1.bf16.msra.mxu0 %v334
    %654 = vmatprep.subr.bf16.mxu0 %v333
    %655 = vmatpush1.bf16.msra.mxu0 %v332
    %656 = vmatprep.subr.bf16.mxu0 %v331
    %657 = vmatpush1.bf16.msra.mxu0 %v330
    %658 = vmatprep.subr.bf16.mxu0 %v329
    %659 = vmatpush1.bf16.msra.mxu0 %v328
    %660 = vmatprep.subr.bf16.mxu0 0
    %661 = vmatpush2.bf16.msra.mxu0 0
    %662 = vmatprep.subr.bf16.mxu0 0
    %663 = vmatpush2.bf16.msra.mxu0 0
    %664 = vmatprep.subr.bf16.mxu0 0
    %665 = vmatpush2.bf16.msra.mxu0 0
    %666 = vmatprep.subr.bf16.mxu0 0
    %667 = vmatpush2.bf16.msra.mxu0 0
    %668 = vmatprep.subr.bf16.mxu0 0
    %669 = vmatpush2.bf16.msra.mxu0 0
    %670 = vmatprep.subr.bf16.mxu0 0
    %671 = vmatpush2.bf16.msra.mxu0 0
    %672 = vmatprep.subr.bf16.mxu0 0
    %673 = vmatpush2.bf16.msra.mxu0 0
    %674 = vmatprep.subr.bf16.mxu0 0
    %675 = vmatpush2.bf16.msra.mxu0 0
    %676 = vmatprep.mubr.bf16.mxu0 0
    %677 = vmatmul.mubr.bf16.gmra.mxu0 %v643
    %v678 = vpop.f32.mrf.mxu0
    %v679 = vadd.f32 0.0, %v678
    %v680 = vpop.f32.mrf.mxu0
    %v681 = vadd.f32 0.0, %v680
    %v682 = vpop.f32.mrf.mxu0
    %v683 = vpop.f32.mrf.mxu0
    %684 = vdwg.mxu0
    %s685 = scalar_lea.vmem [#allocation10], 48
    %v686 = vld [vmem:[%s685] sm:$0xff]
    %v687 = vld [vmem:[%s685 + $0x8] sm:$0xff]
    %vm688 = vcmp.gt.f32.partialorder %v679, %v686
    %vm689 = vcmp.gt.f32.partialorder %v681, %v687
    %v690 = vsel %vm688, 1.0, 0.0
    %v691 = vsel %vm689, 1.0, 0.0
    %v692 = vpack.c.bf16 %v690, %v690
    %v693 = vpack.c.bf16 %v691, %v691
    %694 = vmatprep.subr.bf16.mxu0 0
    %695 = vmatpush1.bf16.msra.mxu0 %v211
    %696 = vmatprep.subr.bf16.mxu0 0
    %697 = vmatpush1.bf16.msra.mxu0 %v210
    %698 = vmatprep.subr.bf16.mxu0 0
    %699 = vmatpush1.bf16.msra.mxu0 %v209
    %700 = vmatprep.subr.bf16.mxu0 0
    %701 = vmatpush1.bf16.msra.mxu0 %v208
    %702 = vmatprep.subr.bf16.mxu0 0
    %703 = vmatpush1.bf16.msra.mxu0 %v207
    %704 = vmatprep.subr.bf16.mxu0 0
    %705 = vmatpush1.bf16.msra.mxu0 %v206
    %706 = vmatprep.subr.bf16.mxu0 0
    %707 = vmatpush1.bf16.msra.mxu0 %v205
    %708 = vmatprep.subr.bf16.mxu0 0
    %709 = vmatpush1.bf16.msra.mxu0 %v204
    %710 = vmatprep.subr.bf16.mxu0 0
    %711 = vmatpush2.bf16.msra.mxu0 %v219
    %712 = vmatprep.subr.bf16.mxu0 0
    %713 = vmatpush2.bf16.msra.mxu0 %v218
    %714 = vmatprep.subr.bf16.mxu0 0
    %715 = vmatpush2.bf16.msra.mxu0 %v217
    %716 = vmatprep.subr.bf16.mxu0 0
    %717 = vmatpush2.bf16.msra.mxu0 %v216
    %718 = vmatprep.subr.bf16.mxu0 0
    %719 = vmatpush2.bf16.msra.mxu0 %v215
    %720 = vmatprep.subr.bf16.mxu0 0
    %721 = vmatpush2.bf16.msra.mxu0 %v214
    %722 = vmatprep.subr.bf16.mxu0 0
    %723 = vmatpush2.bf16.msra.mxu0 %v213
    %724 = vmatprep.subr.bf16.mxu0 0
    %725 = vmatpush2.bf16.msra.mxu0 %v212
    %726 = vmatprep.mubr.bf16.mxu0 %v693
    %727 = vmatmul.mubr.bf16.gmra.mxu0 %v692
    %v728 = vpop.f32.mrf.mxu0
    %v729 = vadd.f32 0.0, %v728
    %v730 = vpop.f32.mrf.mxu0
    %v731 = vpop.f32.mrf.mxu0
    %v732 = vpop.f32.mrf.mxu0
    %733 = vdwg.mxu0
    %s734 = scalar_lea.vmem [#allocation8], 32
    %v735 = vld [vmem:[%s734] sm:$0xff]
    %vm736 = vcmp.gt.f32.partialorder %v729, %v735
    %v737 = vsel %vm736, 1.0, 0.0
    %v738 = vpack.c.bf16 %v737, %v737
    %739 = vmatprep.subr.bf16.mxu0 %v343
    %740 = vmatpush1.bf16.msra.mxu0 %v342
    %741 = vmatprep.subr.bf16.mxu0 %v341
    %742 = vmatpush1.bf16.msra.mxu0 %v340
    %743 = vmatprep.subr.bf16.mxu0 %v339
    %744 = vmatpush1.bf16.msra.mxu0 %v338
    %745 = vmatprep.subr.bf16.mxu0 %v337
    %746 = vmatpush1.bf16.msra.mxu0 %v336
    %747 = vmatprep.subr.bf16.mxu0 %v335
    %748 = vmatpush1.bf16.msra.mxu0 %v334
    %749 = vmatprep.subr.bf16.mxu0 %v333
    %750 = vmatpush1.bf16.msra.mxu0 %v332
    %751 = vmatprep.subr.bf16.mxu0 %v331
    %752 = vmatpush1.bf16.msra.mxu0 %v330
    %753 = vmatprep.subr.bf16.mxu0 %v329
    %754 = vmatpush1.bf16.msra.mxu0 %v328
    %755 = vmatprep.subr.bf16.mxu0 0
    %756 = vmatpush2.bf16.msra.mxu0 0
    %757 = vmatprep.subr.bf16.mxu0 0
    %758 = vmatpush2.bf16.msra.mxu0 0
    %759 = vmatprep.subr.bf16.mxu0 0
    %760 = vmatpush2.bf16.msra.mxu0 0
    %761 = vmatprep.subr.bf16.mxu0 0
    %762 = vmatpush2.bf16.msra.mxu0 0
    %763 = vmatprep.subr.bf16.mxu0 0
    %764 = vmatpush2.bf16.msra.mxu0 0
    %765 = vmatprep.subr.bf16.mxu0 0
    %766 = vmatpush2.bf16.msra.mxu0 0
    %767 = vmatprep.subr.bf16.mxu0 0
    %768 = vmatpush2.bf16.msra.mxu0 0
    %769 = vmatprep.subr.bf16.mxu0 0
    %770 = vmatpush2.bf16.msra.mxu0 0
    %771 = vmatprep.mubr.bf16.mxu0 0
    %772 = vmatmul.mubr.bf16.gmra.mxu0 %v738
    %v773 = vpop.f32.mrf.mxu0
    %v774 = vadd.f32 0.0, %v773
    %v775 = vpop.f32.mrf.mxu0
    %v776 = vadd.f32 0.0, %v775
    %v777 = vpop.f32.mrf.mxu0
    %v778 = vpop.f32.mrf.mxu0
    %779 = vdwg.mxu0
    %s780 = scalar_lea.vmem [#allocation10], 64
    %v781 = vld [vmem:[%s780] sm:$0xff]
    %v782 = vld [vmem:[%s780 + $0x8] sm:$0xff]
    %vm783 = vcmp.gt.f32.partialorder %v774, %v781
    %vm784 = vcmp.gt.f32.partialorder %v776, %v782
    %v785 = vsel %vm783, 1.0, 0.0
    %v786 = vsel %vm784, 1.0, 0.0
    %v787 = vpack.c.bf16 %v785, %v785
    %v788 = vpack.c.bf16 %v786, %v786
    %v789 = vunpack.c.l.bf16 %v787
    %v790 = vunpack.c.l.bf16 %v788
    %791 = vst [vmem:[#allocation11] sm:$0xff] %v789
    %792 = vst [vmem:[#allocation11 + $0x8] sm:$0xff] %v790
    // Predicated region
    $region42: #{tpu_custom_call.1} parent=1 // pred_check
      _
    $region43: #{tpu_custom_call.1} parent=1 // pred_check_branch
      %794 = sbr.rel (0) target = $region45
    $region44: #{tpu_custom_call.1} parent=1 // pred_region
      %s796 = ssub.s32 256, 256
      %797 = vsyncadd [#allocation4], %s796
      %s799 = sshll.u32 [#allocation11], 4
      %s800 = int_to_ptr.vmem [resolvable:$true] %s799
      %802 = dma.vmem_to_hbm [thread:$0]  %s800, 256, %s5, [#allocation4]
    $region45: #{tpu_custom_call.1} parent=1 // pred_fallthru
      _
    // Predicated region
    $region46: #{tpu_custom_call.1} parent=1 // pred_check
      _
    $region47: #{tpu_custom_call.1} parent=1 // pred_check_branch
      %804 = sbr.rel (0) target = $region49
    $region48: #{tpu_custom_call.1} parent=1 // pred_region
      %805 = dma.done [#allocation4], 256
    $region49: #{tpu_custom_call.1} parent=1 // pred_fallthru
      _
    %806 = vsyncpa [#allocation3], 1
    %807 = vsyncpa [#allocation6], 1
    %808 = vsyncpa [#allocation9], 1
    %809 = vsyncpa [#allocation4], 1

</llo_original>
